<compile_context>
chip_gen: v5e
topology: v5e:2x2
jax: 0.10.0
libtpu: 0.0.40
codegen_flags: <defaults>
</compile_context>

<pallas_src>
import functools

import jax
import jax.numpy as jnp
from jax import lax
from jax.experimental import pallas as pl
from jax.experimental.pallas import tpu as pltpu


def _round_up(x, m):
    return (x + m - 1) // m * m


# ---------------------------------------------------------------------------
# Pass 1:  E1 = B^-1 H^T (X W1)        (reduction over node tiles)
# ---------------------------------------------------------------------------
def _n2e_proj_kernel(x_ref, h_ref, w_ref, binv_ref, e1_ref):
    i = pl.program_id(0)

    @pl.when(i == 0)
    def _():
        e1_ref[...] = jnp.zeros_like(e1_ref)

    xw = jnp.dot(x_ref[...], w_ref[...],
                 preferred_element_type=jnp.float32)              # [tn, hid]
    # H_tile^T @ xw : contract the node axis of both (no explicit H.T).
    e1_ref[...] += lax.dot_general(
        h_ref[...], xw.astype(jnp.bfloat16),
        dimension_numbers=(((0,), (0,)), ((), ())),
        preferred_element_type=jnp.float32)                       # [E, hid]

    @pl.when(i == pl.num_programs(0) - 1)
    def _():
        e1_ref[...] *= binv_ref[...]                              # B^-1 scaling


# ---------------------------------------------------------------------------
# Pass 2:  X1 = D^-1 H E1 + b1 (per node tile);  E2^T = B^-1 sum (X1 W2)^T H
# ---------------------------------------------------------------------------
def _e2n_n2e_kernel(h_ref, e1_ref, dinv_ref, b1_ref, w2_ref, binvT_ref, e2t_ref):
    i = pl.program_id(0)

    @pl.when(i == 0)
    def _():
        e2t_ref[...] = jnp.zeros_like(e2t_ref)

    h = h_ref[...]                                                # [tn, E] bf16
    hx = jnp.dot(h, e1_ref[...], preferred_element_type=jnp.float32)
    x1 = dinv_ref[...] * hx + b1_ref[...]                         # [tn, hid] f32
    xw = jnp.dot(x1, w2_ref[...],
                 preferred_element_type=jnp.float32)              # [tn, 3]
    # E2^T += xw^T @ H_tile  (contract node axis)  ->  lane-dense [3, E]
    e2t_ref[...] += lax.dot_general(
        xw.astype(jnp.bfloat16), h,
        dimension_numbers=(((0,), (0,)), ((), ())),
        preferred_element_type=jnp.float32)

    @pl.when(i == pl.num_programs(0) - 1)
    def _():
        e2t_ref[...] *= binvT_ref[...]                            # B^-1 scaling


# ---------------------------------------------------------------------------
# Pass 3:  X2 = D^-1 H E2 + b2 ;  Xe^T = B^-1 sum X2^T H ;  fused edge tail.
# ---------------------------------------------------------------------------
def _final_kernel(h_ref, e2t_ref, dinv_ref, b2_ref, binvT_ref, gumbel_ref,
                  idx_ref, acc_ref, *, dblp_shift):
    i = pl.program_id(0)

    @pl.when(i == 0)
    def _():
        acc_ref[...] = jnp.zeros_like(acc_ref)

    h = h_ref[...]                                                # [tn, E] bf16
    # H_tile @ E2  with E2 carried transposed [3, E]: contract the edge axis.
    hx = lax.dot_general(
        h, e2t_ref[...],
        dimension_numbers=(((1,), (1,)), ((), ())),
        preferred_element_type=jnp.float32)                       # [tn, 3]
    x2 = dinv_ref[...] * hx + b2_ref[...]                         # [tn, 3] f32
    # scatter-mean numerator: Xe^T += X2^T @ H_tile               -> [3, E]
    acc_ref[...] += lax.dot_general(
        x2.astype(jnp.bfloat16), h,
        dimension_numbers=(((0,), (0,)), ((), ())),
        preferred_element_type=jnp.float32)

    @pl.when(i == pl.num_programs(0) - 1)
    def _():
        xe = acc_ref[...] * binvT_ref[...]                        # [3, E]
        s = jax.nn.sigmoid(xe)                                    # EUP
        # normalize_l2 in the reference is row-SUM normalization; sigmoid > 0
        # so the sum is never 0 and the inf-guard is dead -> approx reciprocal.
        rowsum = jnp.sum(s, axis=0, keepdims=True)                # [1, E]
        p = s * pl.reciprocal(rowsum, approx=True)
        if dblp_shift:                                            # Xe[:, 0] += 10
            cls = lax.broadcasted_iota(jnp.int32, p.shape, 0)
            p = p + jnp.where(cls == 0, 10.0, 0.0)
        logits = p + gumbel_ref[...]                              # [3, E]
        # Hard gumbel-softmax forward value == one-hot(argmax); emit index only.
        c0 = logits[0:1, :]
        c1 = logits[1:2, :]
        c2 = logits[2:3, :]
        idx = jnp.where(c1 > c0, 1, 0)
        idx = jnp.where(c2 > jnp.maximum(c0, c1), 2, idx)
        idx_ref[...] = idx.astype(jnp.int32)                      # [1, E]


# ---------------------------------------------------------------------------
# Wrapper
# ---------------------------------------------------------------------------
def hypergraph_view_generator(X, edge_index, overlappness, params, *,
                              num_edges, dblp_shift=False, key=None,
                              tile_n=512):
    """Forward pass of HypergraphViewGenerator with synthetic weights."""
    N, in_dim = X.shape
    E = num_edges
    hid = params["w1"].shape[1]
    out_dim = params["w2"].shape[1]          # 3 classes: reserve/delete/mask
    nodes = edge_index[0]
    edges = edge_index[1]

    # --- graph glue (plain JAX) --------------------------------------------
    # Node tiles are multiples of 16 (bf16 sublane packing); edge axis padded
    # to full lanes.  Padded rows/cols have zero incidence and zero degree so
    # they contribute nothing to any contraction.
    tile_n = _round_up(max(16, min(tile_n, N)), 16)
    N_pad = _round_up(N, tile_n)
    E_pad = _round_up(E, 128)

    # Multiplicity incidence (duplicate (node, edge) pairs counted, matching
    # the torch scatter semantics); small integer counts are exact in bf16.
    H = jnp.zeros((N_pad, E_pad), jnp.float32).at[nodes, edges].add(1.0)
    deg_n = jnp.sum(H, axis=1, keepdims=True)                    # D  [N_pad, 1]
    deg_e = jnp.sum(H, axis=0, keepdims=True)                    # B  [1, E_pad]
    dinv = jnp.where(deg_n == 0.0, 0.0, 1.0 / deg_n)
    binvT = jnp.where(deg_e == 0.0, 0.0, 1.0 / deg_e)            # [1, E_pad]
    binv = binvT.T                                               # [E_pad, 1]
    Hb = H.astype(jnp.bfloat16)

    X_pad = jnp.zeros((N_pad, in_dim), jnp.float32).at[:N].set(
        X.astype(jnp.float32))

    # Deterministic Gumbel noise for gumbel_softmax (lane-dense [3, E]).
    if key is None:
        key = jax.random.PRNGKey(42)
    u = jax.random.uniform(key, (out_dim, E_pad), jnp.float32,
                           minval=1e-6, maxval=1.0 - 1e-6)
    gumbel = -jnp.log(-jnp.log(u))

    w1, b1, w2, b2 = params["w1"], params["b1"], params["w2"], params["b2"]

    grid = (N_pad // tile_n,)
    cp = pltpu.CompilerParams(
        dimension_semantics=("arbitrary",),      # reduction over node tiles
        vmem_limit_bytes=48 * 1024 * 1024)       # > v5e 16 MiB default,
                                                 # < v7x 64 MiB physical

    h_spec = pl.BlockSpec((tile_n, E_pad), lambda i: (i, 0))
    dinv_spec = pl.BlockSpec((tile_n, 1), lambda i: (i, 0))

    def full(shape):
        return pl.BlockSpec(shape, lambda i, _n=len(shape): (0,) * _n)

    # --- pass 1: E1 = B^-1 H^T (X W1) --------------------------------------
    e1 = pl.pallas_call(
        _n2e_proj_kernel,
        out_shape=jax.ShapeDtypeStruct((E_pad, hid), jnp.float32),
        grid=grid,
        in_specs=[
            pl.BlockSpec((tile_n, in_dim), lambda i: (i, 0)),
            h_spec,
            full((in_dim, hid)),
            full((E_pad, 1)),
        ],
        out_specs=full((E_pad, hid)),
        compiler_params=cp,
    )(X_pad, Hb, w1, binv)

    # --- pass 2: X1 = D^-1 H E1 + b1 ;  E2^T = B^-1 (X1 W2)^T H ------------
    e2t = pl.pallas_call(
        _e2n_n2e_kernel,
        out_shape=jax.ShapeDtypeStruct((out_dim, E_pad), jnp.float32),
        grid=grid,
        in_specs=[
            h_spec,
            full((E_pad, hid)),
            dinv_spec,
            full((1, hid)),
            full((hid, out_dim)),
            full((1, E_pad)),
        ],
        out_specs=full((out_dim, E_pad)),
        compiler_params=cp,
    )(Hb, e1.astype(jnp.bfloat16), dinv, b1, w2, binvT)

    # --- pass 3: X2 = D^-1 H E2 + b2 ; Xe = B^-1 H^T X2 ; fused edge tail --
    idx_row = pl.pallas_call(
        functools.partial(_final_kernel, dblp_shift=dblp_shift),
        out_shape=jax.ShapeDtypeStruct((1, E_pad), jnp.int32),
        grid=grid,
        in_specs=[
            h_spec,
            full((out_dim, E_pad)),
            dinv_spec,
            full((1, out_dim)),
            full((1, E_pad)),
            full((out_dim, E_pad)),
        ],
        out_specs=full((1, E_pad)),
        scratch_shapes=[pltpu.VMEM((out_dim, E_pad), jnp.float32)],
        compiler_params=cp,
    )(Hb, e2t.astype(jnp.bfloat16), dinv, b2, binvT, gumbel)

    # --- incidence selection (plain JAX glue) -------------------------------
    idx = idx_row[0, :E]                                         # [E] argmax class
    reserve = idx == 0
    mask = idx == 2

    # TODO(synk): aug_node(overlappness, args) is not defined in the reference;
    # use a deterministic threshold mask as a stand-in.
    sel_mask = overlappness > jnp.mean(overlappness)

    reserve_sample = reserve[edges]
    mask_sample = jnp.logical_and(mask[edges], sel_mask[nodes])
    keep = jnp.logical_or(reserve_sample, mask_sample)

    # TODO(synk): torch does edge_index[:, sample] (dynamic shape); keep static
    # shape by marking dropped incidences with -1 instead of compacting.
    pruned_edge_index = jnp.where(keep[None, :], edge_index, -1)
    return keep.astype(jnp.float32), pruned_edge_index


def init_params(key, in_dim, out_dim):
    hid = in_dim // 2
    k1, k2 = jax.random.split(key)
    return {
        "w1": (jax.random.normal(k1, (in_dim, hid), jnp.float32) * 0.1),
        "b1": jnp.zeros((1, hid), jnp.float32),
        "w2": (jax.random.normal(k2, (hid, out_dim), jnp.float32) * 0.1),
        "b2": jnp.zeros((1, out_dim), jnp.float32),
    }


if __name__ == "__main__":
    key = jax.random.PRNGKey(0)
    k_x, k_ei_n, k_ei_e, k_ov, k_p, k_g = jax.random.split(key, 6)

    N = 40          # nodes
    E = 12          # hyperedges
    NNZ = 96        # (node, hyperedge) incidences
    IN_DIM = 32
    OUT_DIM = 3     # reserve / delete / mask

    X = jax.random.normal(k_x, (N, IN_DIM), jnp.float32)
    edge_index = jnp.stack([
        jax.random.randint(k_ei_n, (NNZ,), 0, N),
        jax.random.randint(k_ei_e, (NNZ,), 0, E),
    ]).astype(jnp.int32)
    overlappness = jax.random.uniform(k_ov, (N,), jnp.float32)
    params = init_params(k_p, IN_DIM, OUT_DIM)

    sample, pruned_ei = hypergraph_view_generator(
        X, edge_index, overlappness, params,
        num_edges=E, dblp_shift=False, key=k_g, tile_n=16)  # grid of 3 node tiles

    jax.block_until_ready(sample)
    jax.block_until_ready(pruned_ei)
    assert sample.shape == (NNZ,) and pruned_ei.shape == (2, NNZ)
    print("KERNEL_OK")
</pallas_src>

<mosaic_0001>
module attributes {stable_mosaic.version = 11 : i64} {
  func.func @_n2e_proj_kernel(%arg0: i32, %arg1: memref<16x32xf32, #tpu.memory_space<vmem>>, %arg2: memref<16x128xbf16, #tpu.memory_space<vmem>>, %arg3: memref<32x16xf32, #tpu.memory_space<vmem>>, %arg4: memref<128x1xf32, #tpu.memory_space<vmem>>, %arg5: memref<128x16xf32, #tpu.memory_space<vmem>>) attributes {dimension_semantics = [#tpu.dimension_semantics<arbitrary>], iteration_bounds = array<i64: 3>, scalar_prefetch = 0 : i64, scratch_operands = 0 : i64, tpu.core_type = #tpu.core_type<tc>, window_params = [{transform_indices = @transform_0, window_bounds = array<i64: 16, 32>}, {transform_indices = @transform_1, window_bounds = array<i64: 16, 128>}, {pipeline_mode = #tpu.pipeline_mode<synchronous>, transform_indices = @transform_2, window_bounds = array<i64: 32, 16>}, {pipeline_mode = #tpu.pipeline_mode<synchronous>, transform_indices = @transform_3, window_bounds = array<i64: 128, 1>}, {pipeline_mode = #tpu.pipeline_mode<synchronous>, transform_indices = @transform_4, window_bounds = array<i64: 128, 16>}]} {
    %c0_i32 = arith.constant 0 : i32
    %0 = arith.cmpi eq, %arg0, %c0_i32 : i32
    %1 = arith.extui %0 : i1 to i32
    %c0_i32_0 = arith.constant 0 : i32
    %2 = arith.cmpi ne, %1, %c0_i32_0 : i32
    scf.if %2 {
      %cst_12 = arith.constant 0.000000e+00 : f32
      %15 = vector.broadcast %cst_12 : f32 to vector<128x16xf32>
      %c0_13 = arith.constant 0 : index
      %c0_14 = arith.constant 0 : index
      %16 = vector.load %arg5[%c0_13, %c0_14] : memref<128x16xf32, #tpu.memory_space<vmem>>, vector<128x16xf32>
      tpu.vector_store %arg5[%c0_13, %c0_14], %15 {strides = array<i32>} : memref<128x16xf32, #tpu.memory_space<vmem>>, vector<128x16xf32>,
    } else {
    }
    %c0 = arith.constant 0 : index
    %c0_1 = arith.constant 0 : index
    %3 = vector.load %arg1[%c0, %c0_1] : memref<16x32xf32, #tpu.memory_space<vmem>>, vector<16x32xf32>
    %c0_2 = arith.constant 0 : index
    %c0_3 = arith.constant 0 : index
    %4 = vector.load %arg3[%c0_2, %c0_3] : memref<32x16xf32, #tpu.memory_space<vmem>>, vector<32x16xf32>
    %cst = arith.constant dense<0.000000e+00> : vector<16x16xf32>
    %5 = tpu.matmul %3, %4, %cst {dimension_numbers = #tpu.dot_dimension_numbers<[1], [0], [0], [1], [0, 0, 1, 1], [], []>} : vector<16x32xf32>, vector<32x16xf32>, vector<16x16xf32> -> vector<16x16xf32>
    %c0_4 = arith.constant 0 : index
    %c0_5 = arith.constant 0 : index
    %6 = vector.load %arg5[%c0_4, %c0_5] : memref<128x16xf32, #tpu.memory_space<vmem>>, vector<128x16xf32>
    %c0_6 = arith.constant 0 : index
    %c0_7 = arith.constant 0 : index
    %7 = vector.load %arg2[%c0_6, %c0_7] : memref<16x128xbf16, #tpu.memory_space<vmem>>, vector<16x128xbf16>
    %8 = arith.truncf %5 : vector<16x16xf32> to vector<16x16xbf16>
    %cst_8 = arith.constant dense<0.000000e+00> : vector<128x16xf32>
    %9 = tpu.matmul %7, %8, %cst_8 {dimension_numbers = #tpu.dot_dimension_numbers<[0], [0], [1], [1], [0, 1, 1, 1], [], []>} : vector<16x128xbf16>, vector<16x16xbf16>, vector<128x16xf32> -> vector<128x16xf32>
    %10 = arith.addf %6, %9 : vector<128x16xf32>
    %c0_9 = arith.constant 0 : index
    %c0_10 = arith.constant 0 : index
    %11 = vector.load %arg5[%c0_9, %c0_10] : memref<128x16xf32, #tpu.memory_space<vmem>>, vector<128x16xf32>
    tpu.vector_store %arg5[%c0_9, %c0_10], %10 {strides = array<i32>} : memref<128x16xf32, #tpu.memory_space<vmem>>, vector<128x16xf32>,
    %c2_i32 = arith.constant 2 : i32
    %12 = arith.cmpi eq, %arg0, %c2_i32 : i32
    %13 = arith.extui %12 : i1 to i32
    %c0_i32_11 = arith.constant 0 : i32
    %14 = arith.cmpi ne, %13, %c0_i32_11 : i32
    scf.if %14 {
      %c0_12 = arith.constant 0 : index
      %c0_13 = arith.constant 0 : index
      %15 = vector.load %arg5[%c0_12, %c0_13] : memref<128x16xf32, #tpu.memory_space<vmem>>, vector<128x16xf32>
      %c0_14 = arith.constant 0 : index
      %c0_15 = arith.constant 0 : index
      %16 = vector.load %arg4[%c0_14, %c0_15] : memref<128x1xf32, #tpu.memory_space<vmem>>, vector<128x1xf32>
      %17 = vector.broadcast %16 : vector<128x1xf32> to vector<128x16xf32>
      %18 = arith.mulf %15, %17 : vector<128x16xf32>
      %c0_16 = arith.constant 0 : index
      %c0_17 = arith.constant 0 : index
      %19 = vector.load %arg5[%c0_16, %c0_17] : memref<128x16xf32, #tpu.memory_space<vmem>>, vector<128x16xf32>
      tpu.vector_store %arg5[%c0_16, %c0_17], %18 {strides = array<i32>} : memref<128x16xf32, #tpu.memory_space<vmem>>, vector<128x16xf32>,
    } else {
    }
    return
  }
  func.func @transform_0(%arg0: i32) -> (i32, i32) {
    %c0_i32 = arith.constant 0 : i32
    %c0_i32_0 = arith.constant 0 : i32
    return %arg0, %c0_i32 : i32, i32
  }
  func.func @transform_1(%arg0: i32) -> (i32, i32) {
    %c0_i32 = arith.constant 0 : i32
    %c0_i32_0 = arith.constant 0 : i32
    return %arg0, %c0_i32 : i32, i32
  }
  func.func @transform_2(%arg0: i32) -> (i32, i32) {
    %c0_i32 = arith.constant 0 : i32
    %c0_i32_0 = arith.constant 0 : i32
    %c0_i32_1 = arith.constant 0 : i32
    return %c0_i32, %c0_i32_0 : i32, i32
  }
  func.func @transform_3(%arg0: i32) -> (i32, i32) {
    %c0_i32 = arith.constant 0 : i32
    %c0_i32_0 = arith.constant 0 : i32
    %c0_i32_1 = arith.constant 0 : i32
    return %c0_i32, %c0_i32_0 : i32, i32
  }
  func.func @transform_4(%arg0: i32) -> (i32, i32) {
    %c0_i32 = arith.constant 0 : i32
    %c0_i32_0 = arith.constant 0 : i32
    %c0_i32_1 = arith.constant 0 : i32
    return %c0_i32, %c0_i32_0 : i32, i32
  }
}

</mosaic_0001>

<llo_original>
// kernel: tpu_custom_call.1
$region0: #{tpu_custom_call.1}
  #allocation0 [shape = 'u32[]', space=smem, size = 0x4, offset = 0x4, fixed_abs, tag = 'smem constant byte address 0x4 - core index']
  #allocation1 [shape = 'u32[72,128]{1,0:T(1,128)}', space=vmem, size = 0x9000, scoped, tag = 'internal scratch']
  %s0 = inlined_call_operand.vmem [shape: f32[48,32], index: 0, kind: input, shape index: {}]
  %s1 = inlined_call_operand.vmem [shape: bf16[48,128], index: 1, kind: input, shape index: {}]
  %s2 = inlined_call_operand.vmem [shape: f32[32,16], index: 2, kind: input, shape index: {}]
  %s3 = inlined_call_operand.vmem [shape: f32[128,1], index: 3, kind: input, shape index: {}]
  %s4 = inlined_call_operand.vmem [shape: f32[128,16], index: 4, kind: output, shape index: {}]
  %s5 = sld [smem:[#allocation0]]
  $region57: #{tpu_custom_call.1} parent=0
    _
  %s7 = ssub.s32 1, %s5
  %s8 = scalar_select 0, %s7, %s5
  loop: start=0, step=1, limit=5
  $region2: #{tpu_custom_call.1} parent=0 // loop_pre_header
    _
  $region3: #{tpu_custom_call.1} parent=0 // loop_header
    %s10 = sphi 0, %s14
    %p11 = scmp.ge.s32.totalorder %s10, 5
    %s20 = sphi 0, %s22
    %s23 = sphi 0, %s20
    %s24 = sphi 0, %s23
    %s40 = sphi 0, %s24
    %s46 = sphi 0, %s48
    %s49 = sphi 0, %s46
    %s50 = sphi 0, %s49
    %s66 = sphi 0, %s50
    %s70 = sphi 0, %s70
    %s72 = sphi 0, %s70
    %s73 = sphi 0, %s72
    %s87 = sphi 0, %s73
    %s91 = sphi 0, %s91
    %s93 = sphi 0, %s91
    %s94 = sphi 0, %s93
    %s108 = sphi 0, %s94
    %s112 = sphi 0, %s112
    %s114 = sphi 0, %s112
    %s115 = sphi 0, %s114
    %s129 = sphi 0, %s115
  $region4: #{tpu_custom_call.1} parent=0 // loop_header_branch
    %13 = sbr.rel (%p11) target = $region8
  $region5: #{tpu_custom_call.1} parent=0 // loop_body
    %s15 = ssub.s32 %s10, 1
    %s16 = ssub.s32 %s10, 2
    %s17 = sadd.s32 %s10, 1
    %s18 = ssub.s32 %s10, %s17
    %p19 = scmp.eq.s32.totalorder %s18, 0
    %s21 = sadd.s32 %s20, 1
    %s22 = scalar_select %p19, %s20, %s21
    %p25 = pneg %p19
    %p26 = scmp.eq.s32.totalorder %s10, 2
    %p27 = por %p25, %p26
    %p28 = scmp.ne.s32.totalorder %s20, %s23
    %p29 = scmp.eq.s32.totalorder %s10, 0
    %p30 = por %p28, %p29
    %p31 = scmp.ne.s32.totalorder %s20, %s23
    %p32 = scmp.eq.s32.totalorder %s15, 2
    %p33 = por %p31, %p32
    %p34 = scmp.ne.s32.totalorder %s23, %s24
    %p35 = scmp.eq.s32.totalorder %s15, 0
    %p36 = por %p34, %p35
    %p37 = scmp.ne.s32.totalorder %s23, %s24
    %p38 = scmp.eq.s32.totalorder %s16, 2
    %p39 = por %p37, %p38
    %p41 = scmp.ne.s32.totalorder %s24, %s40
    %p42 = scmp.eq.s32.totalorder %s16, 0
    %p43 = por %p41, %p42
    %s44 = ssub.s32 %s10, %s17
    %p45 = scmp.eq.s32.totalorder %s44, 0
    %s47 = sadd.s32 %s46, 1
    %s48 = scalar_select %p45, %s46, %s47
    %p51 = pneg %p45
    %p52 = scmp.eq.s32.totalorder %s10, 2
    %p53 = por %p51, %p52
    %p54 = scmp.ne.s32.totalorder %s46, %s49
    %p55 = scmp.eq.s32.totalorder %s10, 0
    %p56 = por %p54, %p55
    %p57 = scmp.ne.s32.totalorder %s46, %s49
    %p58 = scmp.eq.s32.totalorder %s15, 2
    %p59 = por %p57, %p58
    %p60 = scmp.ne.s32.totalorder %s49, %s50
    %p61 = scmp.eq.s32.totalorder %s15, 0
    %p62 = por %p60, %p61
    %p63 = scmp.ne.s32.totalorder %s49, %s50
    %p64 = scmp.eq.s32.totalorder %s16, 2
    %p65 = por %p63, %p64
    %p67 = scmp.ne.s32.totalorder %s50, %s66
    %p68 = scmp.eq.s32.totalorder %s16, 0
    %p69 = por %p67, %p68
    %s71 = sadd.s32 %s70, 1
    %p74 = scmp.eq.s32.totalorder %s10, 2
    %p75 = scmp.ne.s32.totalorder %s70, %s72
    %p76 = scmp.eq.s32.totalorder %s10, 0
    %p77 = por %p75, %p76
    %p78 = scmp.ne.s32.totalorder %s70, %s72
    %p79 = scmp.eq.s32.totalorder %s15, 2
    %p80 = por %p78, %p79
    %p81 = scmp.ne.s32.totalorder %s72, %s73
    %p82 = scmp.eq.s32.totalorder %s15, 0
    %p83 = por %p81, %p82
    %p84 = scmp.ne.s32.totalorder %s72, %s73
    %p85 = scmp.eq.s32.totalorder %s16, 2
    %p86 = por %p84, %p85
    %p88 = scmp.ne.s32.totalorder %s73, %s87
    %p89 = scmp.eq.s32.totalorder %s16, 0
    %p90 = por %p88, %p89
    %s92 = sadd.s32 %s91, 1
    %p95 = scmp.eq.s32.totalorder %s10, 2
    %p96 = scmp.ne.s32.totalorder %s91, %s93
    %p97 = scmp.eq.s32.totalorder %s10, 0
    %p98 = por %p96, %p97
    %p99 = scmp.ne.s32.totalorder %s91, %s93
    %p100 = scmp.eq.s32.totalorder %s15, 2
    %p101 = por %p99, %p100
    %p102 = scmp.ne.s32.totalorder %s93, %s94
    %p103 = scmp.eq.s32.totalorder %s15, 0
    %p104 = por %p102, %p103
    %p105 = scmp.ne.s32.totalorder %s93, %s94
    %p106 = scmp.eq.s32.totalorder %s16, 2
    %p107 = por %p105, %p106
    %p109 = scmp.ne.s32.totalorder %s94, %s108
    %p110 = scmp.eq.s32.totalorder %s16, 0
    %p111 = por %p109, %p110
    %s113 = sadd.s32 %s112, 1
    %p116 = scmp.eq.s32.totalorder %s10, 2
    %p117 = scmp.ne.s32.totalorder %s112, %s114
    %p118 = scmp.eq.s32.totalorder %s10, 0
    %p119 = por %p117, %p118
    %p120 = scmp.ne.s32.totalorder %s112, %s114
    %p121 = scmp.eq.s32.totalorder %s15, 2
    %p122 = por %p120, %p121
    %p123 = scmp.ne.s32.totalorder %s114, %s115
    %p124 = scmp.eq.s32.totalorder %s15, 0
    %p125 = por %p123, %p124
    %p126 = scmp.ne.s32.totalorder %s114, %s115
    %p127 = scmp.eq.s32.totalorder %s16, 2
    %p128 = por %p126, %p127
    %p130 = scmp.ne.s32.totalorder %s115, %s129
    %p131 = scmp.eq.s32.totalorder %s16, 0
    %p132 = por %p130, %p131
    %p133 = scmp.le.s32.totalorder 1, %s10
    %p134 = scmp.lt.s32.totalorder %s10, 4
    %p135 = pnand %p133, %p134
    %p136 = pneg %p135
    // Predicated region
    $region9: #{tpu_custom_call.1} parent=5 // pred_check
      _
    $region10: #{tpu_custom_call.1} parent=5 // pred_check_branch
      %138 = sbr.rel (%p135) target = $region12
    $region11: #{tpu_custom_call.1} parent=5 // pred_region
      %s139 = ssub.s32 %s10, 1
      // Predicated region
      $region13: #{tpu_custom_call.1} parent=11 // pred_check
        %p140 = pneg %p83
      $region14: #{tpu_custom_call.1} parent=11 // pred_check_branch
        %142 = sbr.rel (%p140) target = $region16
      $region15: #{tpu_custom_call.1} parent=11 // pred_region
        _
      $region16: #{tpu_custom_call.1} parent=11 // pred_fallthru
        _
      // Predicated region
      $region17: #{tpu_custom_call.1} parent=11 // pred_check
        %p143 = pneg %p104
      $region18: #{tpu_custom_call.1} parent=11 // pred_check_branch
        %145 = sbr.rel (%p143) target = $region20
      $region19: #{tpu_custom_call.1} parent=11 // pred_region
        _
      $region20: #{tpu_custom_call.1} parent=11 // pred_fallthru
        _
    $region12: #{tpu_custom_call.1} parent=5 // pred_fallthru
      _
    %p146 = scmp.lt.s32.totalorder %s10, 3
    // Predicated region
    $region21: #{tpu_custom_call.1} parent=5 // pred_check
      %p147 = pneg %p146
    $region22: #{tpu_custom_call.1} parent=5 // pred_check_branch
      %149 = sbr.rel (%p147) target = $region24
    $region23: #{tpu_custom_call.1} parent=5 // pred_region
      // Predicated region
      $region25: #{tpu_custom_call.1} parent=23 // pred_check
        %p150 = pneg %p30
      $region26: #{tpu_custom_call.1} parent=23 // pred_check_branch
        %152 = sbr.rel (%p150) target = $region28
      $region27: #{tpu_custom_call.1} parent=23 // pred_region
        %s153 = smul.u32 2, %s10
        %p154 = scmp.lt.s32.totalorder %s153, 5
        %s155 = scalar_select %p154, %s153, 5
        %s156 = smul.addr %s155, 8
        %s157 = scalar_lea.vmem %s0, %s156
        %s158 = smul.u32 2, %s10
      $region28: #{tpu_custom_call.1} parent=23 // pred_fallthru
        _
      // Predicated region
      $region29: #{tpu_custom_call.1} parent=23 // pred_check
        %p159 = pneg %p56
      $region30: #{tpu_custom_call.1} parent=23 // pred_check_branch
        %161 = sbr.rel (%p159) target = $region32
      $region31: #{tpu_custom_call.1} parent=23 // pred_region
        %s162 = smul.u32 2, %s10
        %p163 = scmp.lt.s32.totalorder %s162, 5
        %s164 = scalar_select %p163, %s162, 5
        %s165 = smul.addr %s164, 4
        %s166 = scalar_lea.vmem %s1, %s165
        %s167 = smul.u32 2, %s10
      $region32: #{tpu_custom_call.1} parent=23 // pred_fallthru
        _
    $region24: #{tpu_custom_call.1} parent=5 // pred_fallthru
      _
    %p168 = scmp.le.s32.totalorder 1, %s10
    %p169 = scmp.lt.s32.totalorder %s10, 4
    %p170 = pnand %p168, %p169
    %p171 = pneg %p170
    // Predicated region
    $region33: #{tpu_custom_call.1} parent=5 // pred_check
      _
    $region34: #{tpu_custom_call.1} parent=5 // pred_check_branch
      %173 = sbr.rel (%p170) target = $region36
    $region35: #{tpu_custom_call.1} parent=5 // pred_region
      %s174 = ssub.s32 %s10, 1
      %s175 = smul.u32 2, %s15
      %p176 = scmp.lt.s32.totalorder %s175, 5
      %s177 = scalar_select %p176, %s175, 5
      %s178 = smul.addr %s177, 8
      %s179 = scalar_lea.vmem %s0, %s178
      %p180 = pneg %p36
      %p181 = pneg %p33
      %s182 = smul.u32 2, %s15
      %p183 = scmp.lt.s32.totalorder %s182, 5
      %s184 = scalar_select %p183, %s182, 5
      %s185 = smul.addr %s184, 4
      %s186 = scalar_lea.vmem %s1, %s185
      %p187 = pneg %p62
      %p188 = pneg %p59
      %p189 = pneg %p83
      %p190 = pneg %p80
      %p191 = pneg %p104
      %p192 = pneg %p101
      %p193 = pneg %p125
      %p194 = pneg %p122
      %s195 = smul.u32 2, %s15
      %p196 = scmp.lt.s32.totalorder %s195, 5
      %s197 = scalar_select %p196, %s195, 5
      %s198 = smul.addr %s197, 8
      %s199 = scalar_lea.vmem %s0, %s198
      %s200 = smul.u32 2, %s15
      %s201 = smul.u32 2, %s15
      %p202 = scmp.lt.s32.totalorder %s201, 5
      %s203 = scalar_select %p202, %s201, 5
      %s204 = smul.addr %s203, 4
      %s205 = scalar_lea.vmem %s1, %s204
      %s206 = smul.u32 2, %s15
      %p208 = scmp.eq.s32.totalorder %s15, 0
      // Predicated region
      $region37: #{tpu_custom_call.1} parent=35 // pred_check
        %p209 = pneg %p208
      $region38: #{tpu_custom_call.1} parent=35 // pred_check_branch
        %211 = sbr.rel (%p209) target = $region40
      $region39: #{tpu_custom_call.1} parent=35 // pred_region
        %vm212 = vcmask 130048
        %213 = vst.msk [vmem:[%s4] sm:$0xff] %vm212, 0.0
        %214 = vst.msk [vmem:[%s4 + $0x8] sm:$0xff] %vm212, 0.0
        %215 = vst.msk [vmem:[%s4 + $0x10] sm:$0xff] %vm212, 0.0
        %216 = vst.msk [vmem:[%s4 + $0x18] sm:$0xff] %vm212, 0.0
        %217 = vst.msk [vmem:[%s4 + $0x20] sm:$0xff] %vm212, 0.0
        %218 = vst.msk [vmem:[%s4 + $0x28] sm:$0xff] %vm212, 0.0
        %219 = vst.msk [vmem:[%s4 + $0x30] sm:$0xff] %vm212, 0.0
        %220 = vst.msk [vmem:[%s4 + $0x38] sm:$0xff] %vm212, 0.0
        %221 = vst.msk [vmem:[%s4 + $0x40] sm:$0xff] %vm212, 0.0
        %222 = vst.msk [vmem:[%s4 + $0x48] sm:$0xff] %vm212, 0.0
        %223 = vst.msk [vmem:[%s4 + $0x50] sm:$0xff] %vm212, 0.0
        %224 = vst.msk [vmem:[%s4 + $0x58] sm:$0xff] %vm212, 0.0
        %225 = vst.msk [vmem:[%s4 + $0x60] sm:$0xff] %vm212, 0.0
        %226 = vst.msk [vmem:[%s4 + $0x68] sm:$0xff] %vm212, 0.0
        %227 = vst.msk [vmem:[%s4 + $0x70] sm:$0xff] %vm212, 0.0
        %228 = vst.msk [vmem:[%s4 + $0x78] sm:$0xff] %vm212, 0.0
      $region40: #{tpu_custom_call.1} parent=35 // pred_fallthru
        _
      %v229 = vld [vmem:[%s199] sm:$0xff]
      %v230 = vld [vmem:[%s199 + $0x8] sm:$0xff]
      %v231 = vld [vmem:[%s2] sm:$0xff]
      %v232 = vld [vmem:[%s2 + $0x8] sm:$0xff]
      %v233 = vld [vmem:[%s2 + $0x10] sm:$0xff]
      %v234 = vld [vmem:[%s2 + $0x18] sm:$0xff]
      %vm235 = vcmask 261120
      %v237 = vsel %vm235, %v229, 0
      %v240 = vsel %vm235, %v230, 0
      %242 = vmatpush.msra.mxu0 0.0
      %243 = vmatpush.msra.mxu0 0.0
      %244 = vmatpush.msra.mxu0 0.0
      %245 = vmatpush.msra.mxu0 0.0
      %246 = vmatpush.msra.mxu0 0.0
      %247 = vmatpush.msra.mxu0 0.0
      %248 = vmatpush.msra.mxu0 0.0
      %249 = vmatpush.msra.mxu0 0.0
      %250 = vmatpush.msra.mxu0 0.0
      %251 = vmatpush.msra.mxu0 0.0
      %252 = vmatpush.msra.mxu0 0.0
      %253 = vmatpush.msra.mxu0 0.0
      %254 = vmatpush.msra.mxu0 %v234
      %255 = vmatpush.msra.mxu0 %v233
      %256 = vmatpush.msra.mxu0 %v232
      %257 = vmatpush.msra.mxu0 %v231
      %258 = vmatmul.f32.gmra.mxu0 %v237
      %v259 = vpop.f32.mrf.mxu0
      %v260 = vadd.f32 0.0, %v259
      %261 = vmatmul.f32.gmra.mxu0 %v240
      %v262 = vpop.f32.mrf.mxu0
      %v263 = vadd.f32 0.0, %v262
      %264 = vdwg.mxu0
      %v265 = vld [vmem:[%s4] sm:$0xff]
      %v266 = vld [vmem:[%s4 + $0x8] sm:$0xff]
      %v267 = vld [vmem:[%s4 + $0x10] sm:$0xff]
      %v268 = vld [vmem:[%s4 + $0x18] sm:$0xff]
      %v269 = vld [vmem:[%s4 + $0x20] sm:$0xff]
      %v270 = vld [vmem:[%s4 + $0x28] sm:$0xff]
      %v271 = vld [vmem:[%s4 + $0x30] sm:$0xff]
      %v272 = vld [vmem:[%s4 + $0x38] sm:$0xff]
      %v273 = vld [vmem:[%s4 + $0x40] sm:$0xff]
      %v274 = vld [vmem:[%s4 + $0x48] sm:$0xff]
      %v275 = vld [vmem:[%s4 + $0x50] sm:$0xff]
      %v276 = vld [vmem:[%s4 + $0x58] sm:$0xff]
      %v277 = vld [vmem:[%s4 + $0x60] sm:$0xff]
      %v278 = vld [vmem:[%s4 + $0x68] sm:$0xff]
      %v279 = vld [vmem:[%s4 + $0x70] sm:$0xff]
      %v280 = vld [vmem:[%s4 + $0x78] sm:$0xff]
      %v281 = vld [vmem:[%s205] sm:$0xf]
      %v282 = vld [vmem:[%s205 + $0x4] sm:$0xf]
      %v283 = vpack.c.bf16 %v263, %v260
      %v286 = vunpack.c.l.b16 %v281
      %v287 = vunpack.c.l.b16 %v282
      %v288 = vpack.c.b16 %v287, %v286
      %290 = vxpose.xlu0.c.b16.start [1/8] %v288, 128
      %291 = vxpose.xlu0.c.b16.cont [2/8] 0, 128
      %292 = vxpose.xlu0.c.b16.cont [3/8] 0, 128
      %293 = vxpose.xlu0.c.b16.cont [4/8] 0, 128
      %294 = vxpose.xlu0.c.b16.cont [5/8] 0, 128
      %295 = vxpose.xlu0.c.b16.cont [6/8] 0, 128
      %296 = vxpose.xlu0.c.b16.cont [7/8] 0, 128
      %297 = vxpose.xlu0.c.b16.end [8/8] 0, 128
      %v298 = vpop.trf.xlu0
      %v299 = vpop.trf.xlu0
      %v300 = vpop.trf.xlu0
      %v301 = vpop.trf.xlu0
      %v302 = vpop.trf.xlu0
      %v303 = vpop.trf.xlu0
      %v304 = vpop.trf.xlu0
      %v305 = vpop.trf.xlu0
      %vm306 = vcmask 130048
      %v308 = vsel %vm306, %v298, 0
      %v311 = vsel %vm306, %v299, 0
      %v314 = vsel %vm306, %v300, 0
      %v317 = vsel %vm306, %v301, 0
      %v320 = vsel %vm306, %v302, 0
      %v323 = vsel %vm306, %v303, 0
      %v326 = vsel %vm306, %v304, 0
      %v329 = vsel %vm306, %v305, 0
      %331 = vmatpush.bf16.msra.mxu0 0
      %332 = vmatpush.bf16.msra.mxu0 0
      %333 = vmatpush.bf16.msra.mxu0 0
      %334 = vmatpush.bf16.msra.mxu0 0
      %335 = vmatpush.bf16.msra.mxu0 0
      %336 = vmatpush.bf16.msra.mxu0 0
      %337 = vmatpush.bf16.msra.mxu0 0
      %338 = vmatpush.bf16.msra.mxu0 %v283
      %339 = vmatmul.bf16.gmra.mxu0 %v308
      %v340 = vpop.f32.mrf.mxu0
      %v341 = vadd.f32 0.0, %v340
      %v342 = vpop.f32.mrf.mxu0
      %v343 = vadd.f32 0.0, %v342
      %344 = vmatmul.bf16.gmra.mxu0 %v311
      %v345 = vpop.f32.mrf.mxu0
      %v346 = vadd.f32 0.0, %v345
      %v347 = vpop.f32.mrf.mxu0
      %v348 = vadd.f32 0.0, %v347
      %349 = vmatmul.bf16.gmra.mxu0 %v314
      %v350 = vpop.f32.mrf.mxu0
      %v351 = vadd.f32 0.0, %v350
      %v352 = vpop.f32.mrf.mxu0
      %v353 = vadd.f32 0.0, %v352
      %354 = vmatmul.bf16.gmra.mxu0 %v317
      %v355 = vpop.f32.mrf.mxu0
      %v356 = vadd.f32 0.0, %v355
      %v357 = vpop.f32.mrf.mxu0
      %v358 = vadd.f32 0.0, %v357
      %359 = vmatmul.bf16.gmra.mxu0 %v320
      %v360 = vpop.f32.mrf.mxu0
      %v361 = vadd.f32 0.0, %v360
      %v362 = vpop.f32.mrf.mxu0
      %v363 = vadd.f32 0.0, %v362
      %364 = vmatmul.bf16.gmra.mxu0 %v323
      %v365 = vpop.f32.mrf.mxu0
      %v366 = vadd.f32 0.0, %v365
      %v367 = vpop.f32.mrf.mxu0
      %v368 = vadd.f32 0.0, %v367
      %369 = vmatmul.bf16.gmra.mxu0 %v326
      %v370 = vpop.f32.mrf.mxu0
      %v371 = vadd.f32 0.0, %v370
      %v372 = vpop.f32.mrf.mxu0
      %v373 = vadd.f32 0.0, %v372
      %374 = vmatmul.bf16.gmra.mxu0 %v329
      %v375 = vpop.f32.mrf.mxu0
      %v376 = vadd.f32 0.0, %v375
      %v377 = vpop.f32.mrf.mxu0
      %v378 = vadd.f32 0.0, %v377
      %379 = vdwg.mxu0
      %v380 = vadd.f32 %v265, %v341
      %v381 = vadd.f32 %v266, %v343
      %v382 = vadd.f32 %v267, %v346
      %v383 = vadd.f32 %v268, %v348
      %v384 = vadd.f32 %v269, %v351
      %v385 = vadd.f32 %v270, %v353
      %v386 = vadd.f32 %v271, %v356
      %v387 = vadd.f32 %v272, %v358
      %v388 = vadd.f32 %v273, %v361
      %v389 = vadd.f32 %v274, %v363
      %v390 = vadd.f32 %v275, %v366
      %v391 = vadd.f32 %v276, %v368
      %v392 = vadd.f32 %v277, %v371
      %v393 = vadd.f32 %v278, %v373
      %v394 = vadd.f32 %v279, %v376
      %v395 = vadd.f32 %v280, %v378
      %396 = vst.msk [vmem:[%s4] sm:$0xff] %vm306, %v380
      %397 = vst.msk [vmem:[%s4 + $0x8] sm:$0xff] %vm306, %v381
      %398 = vst.msk [vmem:[%s4 + $0x10] sm:$0xff] %vm306, %v382
      %399 = vst.msk [vmem:[%s4 + $0x18] sm:$0xff] %vm306, %v383
      %400 = vst.msk [vmem:[%s4 + $0x20] sm:$0xff] %vm306, %v384
      %401 = vst.msk [vmem:[%s4 + $0x28] sm:$0xff] %vm306, %v385
      %402 = vst.msk [vmem:[%s4 + $0x30] sm:$0xff] %vm306, %v386
      %403 = vst.msk [vmem:[%s4 + $0x38] sm:$0xff] %vm306, %v387
      %404 = vst.msk [vmem:[%s4 + $0x40] sm:$0xff] %vm306, %v388
      %405 = vst.msk [vmem:[%s4 + $0x48] sm:$0xff] %vm306, %v389
      %406 = vst.msk [vmem:[%s4 + $0x50] sm:$0xff] %vm306, %v390
      %407 = vst.msk [vmem:[%s4 + $0x58] sm:$0xff] %vm306, %v391
      %408 = vst.msk [vmem:[%s4 + $0x60] sm:$0xff] %vm306, %v392
      %409 = vst.msk [vmem:[%s4 + $0x68] sm:$0xff] %vm306, %v393
      %410 = vst.msk [vmem:[%s4 + $0x70] sm:$0xff] %vm306, %v394
      %411 = vst.msk [vmem:[%s4 + $0x78] sm:$0xff] %vm306, %v395
      %p412 = scmp.eq.s32.totalorder %s15, 2
      // Predicated region
      $region41: #{tpu_custom_call.1} parent=35 // pred_check
        %p413 = pneg %p412
      $region42: #{tpu_custom_call.1} parent=35 // pred_check_branch
        %415 = sbr.rel (%p413) target = $region44
      $region43: #{tpu_custom_call.1} parent=35 // pred_region
        %v416 = vld [vmem:[%s4] sm:$0xff]
        %v417 = vld [vmem:[%s4 + $0x8] sm:$0xff]
        %v418 = vld [vmem:[%s4 + $0x10] sm:$0xff]
        %v419 = vld [vmem:[%s4 + $0x18] sm:$0xff]
        %v420 = vld [vmem:[%s4 + $0x20] sm:$0xff]
        %v421 = vld [vmem:[%s4 + $0x28] sm:$0xff]
        %v422 = vld [vmem:[%s4 + $0x30] sm:$0xff]
        %v423 = vld [vmem:[%s4 + $0x38] sm:$0xff]
        %v424 = vld [vmem:[%s4 + $0x40] sm:$0xff]
        %v425 = vld [vmem:[%s4 + $0x48] sm:$0xff]
        %v426 = vld [vmem:[%s4 + $0x50] sm:$0xff]
        %v427 = vld [vmem:[%s4 + $0x58] sm:$0xff]
        %v428 = vld [vmem:[%s4 + $0x60] sm:$0xff]
        %v429 = vld [vmem:[%s4 + $0x68] sm:$0xff]
        %v430 = vld [vmem:[%s4 + $0x70] sm:$0xff]
        %v431 = vld [vmem:[%s4 + $0x78] sm:$0xff]
        %v432 = vld [vmem:[%s3] sm:$0xff]
        %v433 = vld [vmem:[%s3 + $0x8] sm:$0xff]
        %v434 = vld [vmem:[%s3 + $0x10] sm:$0xff]
        %v435 = vld [vmem:[%s3 + $0x18] sm:$0xff]
        %v436 = vld [vmem:[%s3 + $0x20] sm:$0xff]
        %v437 = vld [vmem:[%s3 + $0x28] sm:$0xff]
        %v438 = vld [vmem:[%s3 + $0x30] sm:$0xff]
        %v439 = vld [vmem:[%s3 + $0x38] sm:$0xff]
        %v440 = vld [vmem:[%s3 + $0x40] sm:$0xff]
        %v441 = vld [vmem:[%s3 + $0x48] sm:$0xff]
        %v442 = vld [vmem:[%s3 + $0x50] sm:$0xff]
        %v443 = vld [vmem:[%s3 + $0x58] sm:$0xff]
        %v444 = vld [vmem:[%s3 + $0x60] sm:$0xff]
        %v445 = vld [vmem:[%s3 + $0x68] sm:$0xff]
        %v446 = vld [vmem:[%s3 + $0x70] sm:$0xff]
        %v447 = vld [vmem:[%s3 + $0x78] sm:$0xff]
        %449 = vset.pattern.permute.xlu0 0
        %450 = vperm.xlu0 %449, %v432
        %v451 = vpop.permute.xlu0 %450
        %454 = vset.pattern.permute.xlu0 0
        %455 = vperm.xlu0 %454, %v433
        %v456 = vpop.permute.xlu0 %455
        %459 = vset.pattern.permute.xlu0 0
        %460 = vperm.xlu0 %459, %v434
        %v461 = vpop.permute.xlu0 %460
        %464 = vset.pattern.permute.xlu0 0
        %465 = vperm.xlu0 %464, %v435
        %v466 = vpop.permute.xlu0 %465
        %469 = vset.pattern.permute.xlu0 0
        %470 = vperm.xlu0 %469, %v436
        %v471 = vpop.permute.xlu0 %470
        %474 = vset.pattern.permute.xlu0 0
        %475 = vperm.xlu0 %474, %v437
        %v476 = vpop.permute.xlu0 %475
        %479 = vset.pattern.permute.xlu0 0
        %480 = vperm.xlu0 %479, %v438
        %v481 = vpop.permute.xlu0 %480
        %484 = vset.pattern.permute.xlu0 0
        %485 = vperm.xlu0 %484, %v439
        %v486 = vpop.permute.xlu0 %485
        %489 = vset.pattern.permute.xlu0 0
        %490 = vperm.xlu0 %489, %v440
        %v491 = vpop.permute.xlu0 %490
        %494 = vset.pattern.permute.xlu0 0
        %495 = vperm.xlu0 %494, %v441
        %v496 = vpop.permute.xlu0 %495
        %499 = vset.pattern.permute.xlu0 0
        %500 = vperm.xlu0 %499, %v442
        %v501 = vpop.permute.xlu0 %500
        %504 = vset.pattern.permute.xlu0 0
        %505 = vperm.xlu0 %504, %v443
        %v506 = vpop.permute.xlu0 %505
        %509 = vset.pattern.permute.xlu0 0
        %510 = vperm.xlu0 %509, %v444
        %v511 = vpop.permute.xlu0 %510
        %514 = vset.pattern.permute.xlu0 0
        %515 = vperm.xlu0 %514, %v445
        %v516 = vpop.permute.xlu0 %515
        %519 = vset.pattern.permute.xlu0 0
        %520 = vperm.xlu0 %519, %v446
        %v521 = vpop.permute.xlu0 %520
        %524 = vset.pattern.permute.xlu0 0
        %525 = vperm.xlu0 %524, %v447
        %v526 = vpop.permute.xlu0 %525
        %v528 = vmul.f32 %v416, %v451
        %v529 = vmul.f32 %v417, %v456
        %v530 = vmul.f32 %v418, %v461
        %v531 = vmul.f32 %v419, %v466
        %v532 = vmul.f32 %v420, %v471
        %v533 = vmul.f32 %v421, %v476
        %v534 = vmul.f32 %v422, %v481
        %v535 = vmul.f32 %v423, %v486
        %v536 = vmul.f32 %v424, %v491
        %v537 = vmul.f32 %v425, %v496
        %v538 = vmul.f32 %v426, %v501
        %v539 = vmul.f32 %v427, %v506
        %v540 = vmul.f32 %v428, %v511
        %v541 = vmul.f32 %v429, %v516
        %v542 = vmul.f32 %v430, %v521
        %v543 = vmul.f32 %v431, %v526
        %544 = vst.msk [vmem:[%s4] sm:$0xff] %vm306, %v528
        %545 = vst.msk [vmem:[%s4 + $0x8] sm:$0xff] %vm306, %v529
        %546 = vst.msk [vmem:[%s4 + $0x10] sm:$0xff] %vm306, %v530
        %547 = vst.msk [vmem:[%s4 + $0x18] sm:$0xff] %vm306, %v531
        %548 = vst.msk [vmem:[%s4 + $0x20] sm:$0xff] %vm306, %v532
        %549 = vst.msk [vmem:[%s4 + $0x28] sm:$0xff] %vm306, %v533
        %550 = vst.msk [vmem:[%s4 + $0x30] sm:$0xff] %vm306, %v534
        %551 = vst.msk [vmem:[%s4 + $0x38] sm:$0xff] %vm306, %v535
        %552 = vst.msk [vmem:[%s4 + $0x40] sm:$0xff] %vm306, %v536
        %553 = vst.msk [vmem:[%s4 + $0x48] sm:$0xff] %vm306, %v537
        %554 = vst.msk [vmem:[%s4 + $0x50] sm:$0xff] %vm306, %v538
        %555 = vst.msk [vmem:[%s4 + $0x58] sm:$0xff] %vm306, %v539
        %556 = vst.msk [vmem:[%s4 + $0x60] sm:$0xff] %vm306, %v540
        %557 = vst.msk [vmem:[%s4 + $0x68] sm:$0xff] %vm306, %v541
        %558 = vst.msk [vmem:[%s4 + $0x70] sm:$0xff] %vm306, %v542
        %559 = vst.msk [vmem:[%s4 + $0x78] sm:$0xff] %vm306, %v543
      $region44: #{tpu_custom_call.1} parent=35 // pred_fallthru
        _
      // Predicated region
      $region45: #{tpu_custom_call.1} parent=35 // pred_check
        %p560 = pneg %p122
      $region46: #{tpu_custom_call.1} parent=35 // pred_check_branch
        %562 = sbr.rel (%p560) target = $region48
      $region47: #{tpu_custom_call.1} parent=35 // pred_region
        _
      $region48: #{tpu_custom_call.1} parent=35 // pred_fallthru
        _
      // Predicated region
      $region49: #{tpu_custom_call.1} parent=35 // pred_check
        %p563 = pneg %p122
      $region50: #{tpu_custom_call.1} parent=35 // pred_check_branch
        %565 = sbr.rel (%p563) target = $region52
      $region51: #{tpu_custom_call.1} parent=35 // pred_region
        _
      $region52: #{tpu_custom_call.1} parent=35 // pred_fallthru
        _
    $region36: #{tpu_custom_call.1} parent=5 // pred_fallthru
      _
    %p566 = scmp.le.s32.totalorder 2, %s10
    // Predicated region
    $region53: #{tpu_custom_call.1} parent=5 // pred_check
      %p567 = pneg %p566
    $region54: #{tpu_custom_call.1} parent=5 // pred_check_branch
      %569 = sbr.rel (%p567) target = $region56
    $region55: #{tpu_custom_call.1} parent=5 // pred_region
      %s570 = ssub.s32 %s10, 2
    $region56: #{tpu_custom_call.1} parent=5 // pred_fallthru
      _
  $region6: #{tpu_custom_call.1} parent=0 // loop_footer
    %s14 = sadd.s32 1, %s10
  $region7: #{tpu_custom_call.1} parent=0 // loop_footer_branch
    %9 = sbr.rel target = $region3
  $region8: #{tpu_custom_call.1} parent=0 // loop_exit
    _

</llo_original>
